<compile_context>
chip_gen: v5e
topology: v5e:2x2
jax: 0.10.0
libtpu: 0.0.40
codegen_flags: <defaults>
</compile_context>

<pallas_src>
from functools import partial

import jax
import jax.numpy as jnp
from jax import lax
from jax.experimental import pallas as pl
from jax.experimental.pallas import tpu as pltpu

NPAIR = 5     # 10 conv channels packed 2 per 128-lane row -> 5 channel-pair rows
HID = 128     # padded hidden width (real hidden is 25)


# ------------------------------ Pallas kernel -------------------------------

def fused_convnet2_kernel(r_ref, l_ref, bconv_ref, w1q_ref, b1_ref,
                          x2_ref, w2_ref, b2_ref, w3_ref, b3_ref, o_ref):
    # r_ref:     [64*B, 128]   block-diag im2col patches, rows (b, s, k), cols (s, hw)
    # l_ref:     [5*B, 64*B]   block-diag conv weight, rows (r, b)
    # bconv_ref: [5*B, 128]    conv bias broadcast to the packed layout
    # w1q_ref:   [5, 128, 128] dense1 weight, Flatten perm folded in, out padded to 128
    # b1_ref:    [1, 128]
    # x2_ref:    [B, 9]
    # w2_ref:    [9, 128]      dense2 weight (transposed, padded)
    # b2_ref:    [1, 128]
    # w3_ref:    [128, 128]    dense3 weight (transposed, padded)
    # b3_ref:    [1, 128]
    # o_ref:     [B, 128]      padded output (real columns sliced outside)
    B = o_ref.shape[0]

    # --- conv for all samples & all channel pairs: one lane-dense MXU matmul ---
    z = jnp.dot(l_ref[...], r_ref[...], preferred_element_type=jnp.float32)  # [5B,128]
    a = jnp.maximum(z + bconv_ref[...], 0.0)          # a[r*B+b, s*64+hw] = relu(conv)

    # --- dense1: K=640 GEMM decomposed along K into 5 [B,128]@[128,128] matmuls ---
    y1 = b1_ref[...]                                   # [1,128], broadcasts to [B,128]
    for r in range(NPAIR):
        y1 = y1 + jnp.dot(a[r * B:(r + 1) * B, :], w1q_ref[r],
                          preferred_element_type=jnp.float32)
    y1 = jnp.maximum(y1, 0.0)                          # [B, 128]

    # --- dense2 branch ---
    y2 = jnp.dot(x2_ref[...], w2_ref[...], preferred_element_type=jnp.float32)
    y2 = jnp.maximum(y2 + b2_ref[...], 0.0)            # [B, 128]

    # --- dense3 + relu ---
    y = jnp.dot(y1 + y2, w3_ref[...], preferred_element_type=jnp.float32)
    o_ref[...] = jnp.maximum(y + b3_ref[...], 0.0)


# --------------------- one-time (hoisted) weight preparation ------------------

def prepare_params(params, batch_size):
    """Pad / permute / block-diagonalize the module weights once, outside the
    per-call forward (review ask: hoist weight prep out of the hot path)."""
    Wc, bc, W1, b1, W2, b2, W3, b3 = params
    B = batch_size
    OUT = W3.shape[0]
    f32 = jnp.float32

    # conv weight -> block-diagonal LHS [5B, 64B]:
    #   L[r*B+b, b'*64 + s*32 + k] = Wc[2r+s, k] * delta(b, b')   (k padded 27->32)
    wcf = jnp.zeros((10, 32), f32).at[:, :27].set(Wc.reshape(10, 27).astype(f32))
    l5 = wcf.reshape(NPAIR, 2, 32)                               # [r, s, k]
    eye_b = jnp.eye(B, dtype=f32)
    l = (l5[:, None, None, :, :] *
         eye_b[None, :, :, None, None]).reshape(NPAIR * B, B * 64)

    # conv bias broadcast to the packed (r*B+b, s*64+hw) layout
    bconv = jnp.broadcast_to(bc.astype(f32).reshape(NPAIR, 1, 2, 1),
                             (NPAIR, B, 2, 64)).reshape(NPAIR * B, 128)

    # dense1 weight: fold the PyTorch Flatten order (c*64 + hw) and the
    # channel-pair packing in:  W1q[r, s*64+hw, o] = W1[o, (2r+s)*64 + hw]
    w1q = jnp.transpose(W1.astype(f32).reshape(25, NPAIR, 2, 64), (1, 2, 3, 0))
    w1q = jnp.zeros((NPAIR, 128, HID), f32).at[:, :, :25].set(
        w1q.reshape(NPAIR, 128, 25))

    b1p = jnp.zeros((1, HID), f32).at[0, :25].set(b1.astype(f32))
    w2p = jnp.zeros((9, HID), f32).at[:, :25].set(W2.T.astype(f32))
    b2p = jnp.zeros((1, HID), f32).at[0, :25].set(b2.astype(f32))
    w3p = jnp.zeros((HID, HID), f32).at[:25, :OUT].set(W3.T.astype(f32))
    b3p = jnp.zeros((1, HID), f32).at[0, :OUT].set(b3.astype(f32))
    return (l, bconv, w1q, b1p, w2p, b2p, w3p, b3p)


# --------------------------------- glue --------------------------------------

def _im2col(x1):
    """x1: [B,3,10,10] NCHW -> P [B, 27, 64], P[b, ci*9+kh*3+kw, oh*8+ow]."""
    B = x1.shape[0]
    shifts = [x1[:, :, kh:kh + 8, kw:kw + 8]
              for kh in range(3) for kw in range(3)]             # 9 x [B,3,8,8]
    return jnp.stack(shifts, axis=2).reshape(B, 27, 64)


def _conv_rhs(x1):
    """Block-diagonal (over channel parity s) im2col RHS, shape [64B, 128]:
       R[b*64 + s'*32 + k, s*64 + hw] = P[b, k, hw] * delta(s', s)."""
    B = x1.shape[0]
    p = _im2col(x1).astype(jnp.float32)
    r = jnp.zeros((B, 2, 32, 2, 64), jnp.float32)
    r = r.at[:, 0, :27, 0, :].set(p)
    r = r.at[:, 1, :27, 1, :].set(p)
    return r.reshape(B * 64, 128)


@partial(jax.jit, static_argnames=("out_dim",))
def test_convnet2_forward(x1, x2, prepped, out_dim):
    """Forward pass of TestConvNet2: one fused Pallas kernel for all compute."""
    l, bconv, w1q, b1p, w2p, b2p, w3p, b3p = prepped
    B = x1.shape[0]

    rmat = _conv_rhs(x1)                                         # [64B, 128]

    flops = 2 * (NPAIR * B * (64 * B) * 128        # conv matmul
                 + NPAIR * B * 128 * HID           # dense1
                 + B * 9 * HID                     # dense2
                 + B * HID * HID)                  # dense3
    bytes_accessed = 4 * (rmat.size + l.size + bconv.size + w1q.size + b1p.size
                          + x2.size + w2p.size + b2p.size + w3p.size + b3p.size
                          + B * HID)
    cost = pl.CostEstimate(flops=flops, transcendentals=0,
                           bytes_accessed=bytes_accessed)

    out_padded = pl.pallas_call(
        fused_convnet2_kernel,
        out_shape=jax.ShapeDtypeStruct((B, HID), jnp.float32),
        in_specs=[pl.BlockSpec(memory_space=pltpu.MemorySpace.VMEM)] * 10,
        out_specs=pl.BlockSpec(memory_space=pltpu.MemorySpace.VMEM),
        cost_estimate=cost,
    )(rmat, l, bconv, w1q, b1p, x2.astype(jnp.float32), w2p, b2p, w3p, b3p)

    return out_padded[:, :out_dim]


# --------------------------- pure-JAX reference ------------------------------

def reference_forward(x1, x2, params):
    Wc, bc, W1, b1, W2, b2, W3, b3 = params
    y1 = lax.conv_general_dilated(
        x1, Wc, window_strides=(1, 1), padding="VALID",
        dimension_numbers=("NCHW", "OIHW", "NCHW"))
    y1 = jnp.maximum(y1 + bc.reshape(1, 10, 1, 1), 0.0)
    y1 = y1.reshape(x1.shape[0], -1)                    # PyTorch Flatten (NCHW)
    y1 = jnp.maximum(y1 @ W1.T + b1, 0.0)
    y2 = jnp.maximum(x2 @ W2.T + b2, 0.0)
    y = jnp.maximum((y1 + y2) @ W3.T + b3, 0.0)
    return y


# --------------------------------- main --------------------------------------

if __name__ == "__main__":
    key = jax.random.PRNGKey(0)
    ks = jax.random.split(key, 10)

    B = 2
    OUT = 6  # output_shape

    # Deterministic synthetic parameters (shapes from the module's __init__).
    Wc = jax.random.normal(ks[0], (10, 3, 3, 3), jnp.float32) * 0.1   # Conv2d(3,10,3)
    bc = jax.random.normal(ks[1], (10,), jnp.float32) * 0.1
    W1 = jax.random.normal(ks[2], (25, 640), jnp.float32) * 0.05      # Linear(640,25)
    b1 = jax.random.normal(ks[3], (25,), jnp.float32) * 0.1
    W2 = jax.random.normal(ks[4], (25, 9), jnp.float32) * 0.1         # Linear(9,25)
    b2 = jax.random.normal(ks[5], (25,), jnp.float32) * 0.1
    W3 = jax.random.normal(ks[6], (OUT, 25), jnp.float32) * 0.1       # Linear(25,OUT)
    b3 = jax.random.normal(ks[7], (OUT,), jnp.float32) * 0.1
    params = (Wc, bc, W1, b1, W2, b2, W3, b3)

    # Inputs: 10x10 spatial so that 10 * 8 * 8 = 640 matches dense1 in-features.
    x1 = jax.random.normal(ks[8], (B, 3, 10, 10), jnp.float32)
    x2 = jax.random.normal(ks[9], (B, 9), jnp.float32)

    # One-time hoisted weight prep (review ask #4).
    prepped = jax.tree_util.tree_map(jax.block_until_ready,
                                     prepare_params(params, B))

    out = jax.block_until_ready(test_convnet2_forward(x1, x2, prepped, OUT))
    ref = jax.block_until_ready(reference_forward(x1, x2, params))

    assert out.shape == (B, OUT)
    assert jnp.allclose(out, ref, atol=1e-4, rtol=1e-4), "mismatch vs reference"
    print("KERNEL_OK")
</pallas_src>

<mosaic_0001>
module attributes {stable_mosaic.version = 11 : i64} {
  func.func @fused_convnet2_kernel(%arg0: memref<128x128xf32, #tpu.memory_space<vmem>>, %arg1: memref<10x128xf32, #tpu.memory_space<vmem>>, %arg2: memref<10x128xf32, #tpu.memory_space<vmem>>, %arg3: memref<5x128x128xf32, #tpu.memory_space<vmem>>, %arg4: memref<1x128xf32, #tpu.memory_space<vmem>>, %arg5: memref<2x9xf32, #tpu.memory_space<vmem>>, %arg6: memref<9x128xf32, #tpu.memory_space<vmem>>, %arg7: memref<1x128xf32, #tpu.memory_space<vmem>>, %arg8: memref<128x128xf32, #tpu.memory_space<vmem>>, %arg9: memref<1x128xf32, #tpu.memory_space<vmem>>, %arg10: memref<2x128xf32, #tpu.memory_space<vmem>>) attributes {dimension_semantics = [], scalar_prefetch = 0 : i64, scratch_operands = 0 : i64, tpu.core_type = #tpu.core_type<tc>} {
    %c0 = arith.constant 0 : index
    %c0_0 = arith.constant 0 : index
    %0 = vector.load %arg1[%c0, %c0_0] : memref<10x128xf32, #tpu.memory_space<vmem>>, vector<10x128xf32>
    %c0_1 = arith.constant 0 : index
    %c0_2 = arith.constant 0 : index
    %1 = vector.load %arg0[%c0_1, %c0_2] : memref<128x128xf32, #tpu.memory_space<vmem>>, vector<128x128xf32>
    %cst = arith.constant dense<0.000000e+00> : vector<10x128xf32>
    %2 = tpu.matmul %0, %1, %cst {dimension_numbers = #tpu.dot_dimension_numbers<[1], [0], [0], [1], [0, 0, 1, 1], [], []>} : vector<10x128xf32>, vector<128x128xf32>, vector<10x128xf32> -> vector<10x128xf32>
    %c0_3 = arith.constant 0 : index
    %c0_4 = arith.constant 0 : index
    %3 = vector.load %arg2[%c0_3, %c0_4] : memref<10x128xf32, #tpu.memory_space<vmem>>, vector<10x128xf32>
    %4 = arith.addf %2, %3 : vector<10x128xf32>
    %cst_5 = arith.constant 0.000000e+00 : f32
    %5 = vector.broadcast %cst_5 : f32 to vector<10x128xf32>
    %6 = arith.maximumf %4, %5 : vector<10x128xf32>
    %c0_6 = arith.constant 0 : index
    %c0_7 = arith.constant 0 : index
    %7 = vector.load %arg4[%c0_6, %c0_7] : memref<1x128xf32, #tpu.memory_space<vmem>>, vector<1x128xf32>
    %8 = vector.extract_strided_slice %6 {offsets = [0, 0], sizes = [2, 128], strides = [1, 1]} : vector<10x128xf32> to vector<2x128xf32>
    %c0_8 = arith.constant 0 : index
    %c0_9 = arith.constant 0 : index
    %c0_10 = arith.constant 0 : index
    %9 = vector.load %arg3[%c0_8, %c0_9, %c0_10] : memref<5x128x128xf32, #tpu.memory_space<vmem>>, vector<1x128x128xf32>
    %10 = vector.shape_cast %9 : vector<1x128x128xf32> to vector<128x128xf32>
    %cst_11 = arith.constant dense<0.000000e+00> : vector<2x128xf32>
    %11 = tpu.matmul %8, %10, %cst_11 {dimension_numbers = #tpu.dot_dimension_numbers<[1], [0], [0], [1], [0, 0, 1, 1], [], []>} : vector<2x128xf32>, vector<128x128xf32>, vector<2x128xf32> -> vector<2x128xf32>
    %12 = vector.broadcast %7 : vector<1x128xf32> to vector<2x128xf32>
    %13 = arith.addf %12, %11 : vector<2x128xf32>
    %14 = vector.extract_strided_slice %6 {offsets = [2, 0], sizes = [2, 128], strides = [1, 1]} : vector<10x128xf32> to vector<2x128xf32>
    %c1 = arith.constant 1 : index
    %c0_12 = arith.constant 0 : index
    %c0_13 = arith.constant 0 : index
    %15 = vector.load %arg3[%c1, %c0_12, %c0_13] : memref<5x128x128xf32, #tpu.memory_space<vmem>>, vector<1x128x128xf32>
    %16 = vector.shape_cast %15 : vector<1x128x128xf32> to vector<128x128xf32>
    %cst_14 = arith.constant dense<0.000000e+00> : vector<2x128xf32>
    %17 = tpu.matmul %14, %16, %cst_14 {dimension_numbers = #tpu.dot_dimension_numbers<[1], [0], [0], [1], [0, 0, 1, 1], [], []>} : vector<2x128xf32>, vector<128x128xf32>, vector<2x128xf32> -> vector<2x128xf32>
    %18 = arith.addf %13, %17 : vector<2x128xf32>
    %19 = vector.extract_strided_slice %6 {offsets = [4, 0], sizes = [2, 128], strides = [1, 1]} : vector<10x128xf32> to vector<2x128xf32>
    %c2 = arith.constant 2 : index
    %c0_15 = arith.constant 0 : index
    %c0_16 = arith.constant 0 : index
    %20 = vector.load %arg3[%c2, %c0_15, %c0_16] : memref<5x128x128xf32, #tpu.memory_space<vmem>>, vector<1x128x128xf32>
    %21 = vector.shape_cast %20 : vector<1x128x128xf32> to vector<128x128xf32>
    %cst_17 = arith.constant dense<0.000000e+00> : vector<2x128xf32>
    %22 = tpu.matmul %19, %21, %cst_17 {dimension_numbers = #tpu.dot_dimension_numbers<[1], [0], [0], [1], [0, 0, 1, 1], [], []>} : vector<2x128xf32>, vector<128x128xf32>, vector<2x128xf32> -> vector<2x128xf32>
    %23 = arith.addf %18, %22 : vector<2x128xf32>
    %24 = vector.extract_strided_slice %6 {offsets = [6, 0], sizes = [2, 128], strides = [1, 1]} : vector<10x128xf32> to vector<2x128xf32>
    %c3 = arith.constant 3 : index
    %c0_18 = arith.constant 0 : index
    %c0_19 = arith.constant 0 : index
    %25 = vector.load %arg3[%c3, %c0_18, %c0_19] : memref<5x128x128xf32, #tpu.memory_space<vmem>>, vector<1x128x128xf32>
    %26 = vector.shape_cast %25 : vector<1x128x128xf32> to vector<128x128xf32>
    %cst_20 = arith.constant dense<0.000000e+00> : vector<2x128xf32>
    %27 = tpu.matmul %24, %26, %cst_20 {dimension_numbers = #tpu.dot_dimension_numbers<[1], [0], [0], [1], [0, 0, 1, 1], [], []>} : vector<2x128xf32>, vector<128x128xf32>, vector<2x128xf32> -> vector<2x128xf32>
    %28 = arith.addf %23, %27 : vector<2x128xf32>
    %29 = vector.extract_strided_slice %6 {offsets = [8, 0], sizes = [2, 128], strides = [1, 1]} : vector<10x128xf32> to vector<2x128xf32>
    %c4 = arith.constant 4 : index
    %c0_21 = arith.constant 0 : index
    %c0_22 = arith.constant 0 : index
    %30 = vector.load %arg3[%c4, %c0_21, %c0_22] : memref<5x128x128xf32, #tpu.memory_space<vmem>>, vector<1x128x128xf32>
    %31 = vector.shape_cast %30 : vector<1x128x128xf32> to vector<128x128xf32>
    %cst_23 = arith.constant dense<0.000000e+00> : vector<2x128xf32>
    %32 = tpu.matmul %29, %31, %cst_23 {dimension_numbers = #tpu.dot_dimension_numbers<[1], [0], [0], [1], [0, 0, 1, 1], [], []>} : vector<2x128xf32>, vector<128x128xf32>, vector<2x128xf32> -> vector<2x128xf32>
    %33 = arith.addf %28, %32 : vector<2x128xf32>
    %cst_24 = arith.constant 0.000000e+00 : f32
    %34 = vector.broadcast %cst_24 : f32 to vector<2x128xf32>
    %35 = arith.maximumf %33, %34 : vector<2x128xf32>
    %c0_25 = arith.constant 0 : index
    %c0_26 = arith.constant 0 : index
    %36 = vector.load %arg5[%c0_25, %c0_26] : memref<2x9xf32, #tpu.memory_space<vmem>>, vector<2x9xf32>
    %c0_27 = arith.constant 0 : index
    %c0_28 = arith.constant 0 : index
    %37 = vector.load %arg6[%c0_27, %c0_28] : memref<9x128xf32, #tpu.memory_space<vmem>>, vector<9x128xf32>
    %cst_29 = arith.constant dense<0.000000e+00> : vector<2x128xf32>
    %38 = tpu.matmul %36, %37, %cst_29 {dimension_numbers = #tpu.dot_dimension_numbers<[1], [0], [0], [1], [0, 0, 1, 1], [], []>} : vector<2x9xf32>, vector<9x128xf32>, vector<2x128xf32> -> vector<2x128xf32>
    %c0_30 = arith.constant 0 : index
    %c0_31 = arith.constant 0 : index
    %39 = vector.load %arg7[%c0_30, %c0_31] : memref<1x128xf32, #tpu.memory_space<vmem>>, vector<1x128xf32>
    %40 = vector.broadcast %39 : vector<1x128xf32> to vector<2x128xf32>
    %41 = arith.addf %38, %40 : vector<2x128xf32>
    %cst_32 = arith.constant 0.000000e+00 : f32
    %42 = vector.broadcast %cst_32 : f32 to vector<2x128xf32>
    %43 = arith.maximumf %41, %42 : vector<2x128xf32>
    %44 = arith.addf %35, %43 : vector<2x128xf32>
    %c0_33 = arith.constant 0 : index
    %c0_34 = arith.constant 0 : index
    %45 = vector.load %arg8[%c0_33, %c0_34] : memref<128x128xf32, #tpu.memory_space<vmem>>, vector<128x128xf32>
    %cst_35 = arith.constant dense<0.000000e+00> : vector<2x128xf32>
    %46 = tpu.matmul %44, %45, %cst_35 {dimension_numbers = #tpu.dot_dimension_numbers<[1], [0], [0], [1], [0, 0, 1, 1], [], []>} : vector<2x128xf32>, vector<128x128xf32>, vector<2x128xf32> -> vector<2x128xf32>
    %c0_36 = arith.constant 0 : index
    %c0_37 = arith.constant 0 : index
    %47 = vector.load %arg9[%c0_36, %c0_37] : memref<1x128xf32, #tpu.memory_space<vmem>>, vector<1x128xf32>
    %48 = vector.broadcast %47 : vector<1x128xf32> to vector<2x128xf32>
    %49 = arith.addf %46, %48 : vector<2x128xf32>
    %cst_38 = arith.constant 0.000000e+00 : f32
    %50 = vector.broadcast %cst_38 : f32 to vector<2x128xf32>
    %51 = arith.maximumf %49, %50 : vector<2x128xf32>
    %c0_39 = arith.constant 0 : index
    %c0_40 = arith.constant 0 : index
    %52 = vector.load %arg10[%c0_39, %c0_40] : memref<2x128xf32, #tpu.memory_space<vmem>>, vector<2x128xf32>
    tpu.vector_store %arg10[%c0_39, %c0_40], %51 {strides = array<i32>} : memref<2x128xf32, #tpu.memory_space<vmem>>, vector<2x128xf32>,
    return
  }
}

</mosaic_0001>

<llo_original>
// kernel: test_convnet2_forward.1
$region0: #{test_convnet2_forward.1}
  #allocation0 [shape = 'u32[]', space=smem, size = 0x4, offset = 0x4, fixed_abs, tag = 'smem constant byte address 0x4 - core index']
  #allocation1 [shape = 'u32[72,128]{1,0:T(1,128)}', space=vmem, size = 0x9000, scoped, tag = 'internal scratch']
  %s0 = inlined_call_operand.vmem [shape: f32[128,128], index: 0, kind: input, shape index: {}]
  %s1 = inlined_call_operand.vmem [shape: f32[10,128], index: 1, kind: input, shape index: {}]
  %s2 = inlined_call_operand.vmem [shape: f32[10,128], index: 2, kind: input, shape index: {}]
  %s3 = inlined_call_operand.vmem [shape: f32[5,128,128], index: 3, kind: input, shape index: {}]
  %s4 = inlined_call_operand.vmem [shape: f32[1,128], index: 4, kind: input, shape index: {}]
  %s5 = inlined_call_operand.vmem [shape: f32[2,9], index: 5, kind: input, shape index: {}]
  %s6 = inlined_call_operand.vmem [shape: f32[9,128], index: 6, kind: input, shape index: {}]
  %s7 = inlined_call_operand.vmem [shape: f32[1,128], index: 7, kind: input, shape index: {}]
  %s8 = inlined_call_operand.vmem [shape: f32[128,128], index: 8, kind: input, shape index: {}]
  %s9 = inlined_call_operand.vmem [shape: f32[1,128], index: 9, kind: input, shape index: {}]
  %s10 = inlined_call_operand.hbm [shape: f32[2,128], index: 10, kind: output, shape index: {}]
  %s11 = sld [smem:[#allocation0]]
  $region50: #{test_convnet2_forward.1} parent=0
    _
  %s13 = ssub.s32 1, %s11
  %s14 = scalar_select 0, %s13, %s11
  $region1: #{test_convnet2_forward.1} parent=0
    #allocation2 [shape = 'u8[1024]{0}', space=vmem, size = 0x400, scoped, tag = 'output window, operand 0, single buffered']
    #allocation3 [shape = 's32[1]{0}', space=sflag, size = 0x4, scoped, tag = 'scoped memory for test_convnet2_forward.1']
    %15 = vsyncpa [#allocation3], 0
    // Predicated region
    $region2: #{test_convnet2_forward.1} parent=1 // pred_check
      _
    $region3: #{test_convnet2_forward.1} parent=1 // pred_check_branch
      %17 = sbr.rel (0) target = $region5
    $region4: #{test_convnet2_forward.1} parent=1 // pred_region
      _
    $region5: #{test_convnet2_forward.1} parent=1 // pred_fallthru
      _
    // Predicated region
    $region6: #{test_convnet2_forward.1} parent=1 // pred_check
      _
    $region7: #{test_convnet2_forward.1} parent=1 // pred_check_branch
      %19 = sbr.rel (0) target = $region9
    $region8: #{test_convnet2_forward.1} parent=1 // pred_region
      _
    $region9: #{test_convnet2_forward.1} parent=1 // pred_fallthru
      _
    // Predicated region
    $region10: #{test_convnet2_forward.1} parent=1 // pred_check
      _
    $region11: #{test_convnet2_forward.1} parent=1 // pred_check_branch
      %21 = sbr.rel (0) target = $region13
    $region12: #{test_convnet2_forward.1} parent=1 // pred_region
      _
    $region13: #{test_convnet2_forward.1} parent=1 // pred_fallthru
      _
    // Predicated region
    $region14: #{test_convnet2_forward.1} parent=1 // pred_check
      _
    $region15: #{test_convnet2_forward.1} parent=1 // pred_check_branch
      %23 = sbr.rel (0) target = $region17
    $region16: #{test_convnet2_forward.1} parent=1 // pred_region
      _
    $region17: #{test_convnet2_forward.1} parent=1 // pred_fallthru
      _
    // Predicated region
    $region18: #{test_convnet2_forward.1} parent=1 // pred_check
      _
    $region19: #{test_convnet2_forward.1} parent=1 // pred_check_branch
      %25 = sbr.rel (0) target = $region21
    $region20: #{test_convnet2_forward.1} parent=1 // pred_region
      _
    $region21: #{test_convnet2_forward.1} parent=1 // pred_fallthru
      _
    // Predicated region
    $region22: #{test_convnet2_forward.1} parent=1 // pred_check
      _
    $region23: #{test_convnet2_forward.1} parent=1 // pred_check_branch
      %27 = sbr.rel (0) target = $region25
    $region24: #{test_convnet2_forward.1} parent=1 // pred_region
      _
    $region25: #{test_convnet2_forward.1} parent=1 // pred_fallthru
      _
    // Predicated region
    $region26: #{test_convnet2_forward.1} parent=1 // pred_check
      _
    $region27: #{test_convnet2_forward.1} parent=1 // pred_check_branch
      %29 = sbr.rel (0) target = $region29
    $region28: #{test_convnet2_forward.1} parent=1 // pred_region
      _
    $region29: #{test_convnet2_forward.1} parent=1 // pred_fallthru
      _
    // Predicated region
    $region30: #{test_convnet2_forward.1} parent=1 // pred_check
      _
    $region31: #{test_convnet2_forward.1} parent=1 // pred_check_branch
      %31 = sbr.rel (0) target = $region33
    $region32: #{test_convnet2_forward.1} parent=1 // pred_region
      _
    $region33: #{test_convnet2_forward.1} parent=1 // pred_fallthru
      _
    // Predicated region
    $region34: #{test_convnet2_forward.1} parent=1 // pred_check
      _
    $region35: #{test_convnet2_forward.1} parent=1 // pred_check_branch
      %33 = sbr.rel (0) target = $region37
    $region36: #{test_convnet2_forward.1} parent=1 // pred_region
      _
    $region37: #{test_convnet2_forward.1} parent=1 // pred_fallthru
      _
    // Predicated region
    $region38: #{test_convnet2_forward.1} parent=1 // pred_check
      _
    $region39: #{test_convnet2_forward.1} parent=1 // pred_check_branch
      %35 = sbr.rel (0) target = $region41
    $region40: #{test_convnet2_forward.1} parent=1 // pred_region
      _
    $region41: #{test_convnet2_forward.1} parent=1 // pred_fallthru
      _
    %v36 = vld [vmem:[%s1] sm:$0xff]
    %v37 = vld [vmem:[%s1 + $0x8] sm:$0x3]
    %v38 = vld [vmem:[%s0] sm:$0xff]
    %v39 = vld [vmem:[%s0 + $0x8] sm:$0xff]
    %v40 = vld [vmem:[%s0 + $0x10] sm:$0xff]
    %v41 = vld [vmem:[%s0 + $0x18] sm:$0xff]
    %v42 = vld [vmem:[%s0 + $0x20] sm:$0xff]
    %v43 = vld [vmem:[%s0 + $0x28] sm:$0xff]
    %v44 = vld [vmem:[%s0 + $0x30] sm:$0xff]
    %v45 = vld [vmem:[%s0 + $0x38] sm:$0xff]
    %v46 = vld [vmem:[%s0 + $0x40] sm:$0xff]
    %v47 = vld [vmem:[%s0 + $0x48] sm:$0xff]
    %v48 = vld [vmem:[%s0 + $0x50] sm:$0xff]
    %v49 = vld [vmem:[%s0 + $0x58] sm:$0xff]
    %v50 = vld [vmem:[%s0 + $0x60] sm:$0xff]
    %v51 = vld [vmem:[%s0 + $0x68] sm:$0xff]
    %v52 = vld [vmem:[%s0 + $0x70] sm:$0xff]
    %v53 = vld [vmem:[%s0 + $0x78] sm:$0xff]
    %v54 = vld [vmem:[%s2] sm:$0xff]
    %v55 = vld [vmem:[%s2 + $0x8] sm:$0x3]
    %56 = vmatpush.msra.mxu0 %v53
    %57 = vmatpush.msra.mxu0 %v52
    %58 = vmatpush.msra.mxu0 %v51
    %59 = vmatpush.msra.mxu0 %v50
    %60 = vmatpush.msra.mxu0 %v49
    %61 = vmatpush.msra.mxu0 %v48
    %62 = vmatpush.msra.mxu0 %v47
    %63 = vmatpush.msra.mxu0 %v46
    %64 = vmatpush.msra.mxu0 %v45
    %65 = vmatpush.msra.mxu0 %v44
    %66 = vmatpush.msra.mxu0 %v43
    %67 = vmatpush.msra.mxu0 %v42
    %68 = vmatpush.msra.mxu0 %v41
    %69 = vmatpush.msra.mxu0 %v40
    %70 = vmatpush.msra.mxu0 %v39
    %71 = vmatpush.msra.mxu0 %v38
    %72 = vmatmul.f32.gmra.mxu0 %v36
    %v73 = vpop.f32.mrf.mxu0
    %v74 = vadd.f32 %v54, %v73
    %75 = vmatmul.f32.gmra.mxu0 %v37
    %v76 = vpop.f32.mrf.mxu0
    %v77 = vadd.f32 %v55, %v76
    %78 = vdwg.mxu0
    %v79 = vmax.f32 %v74, 0.0
    %v80 = vmax.f32 %v77, 0.0
    %v81 = vld [vmem:[%s4] sm:$0x1]
    %v82 = vld [vmem:[%s3] sm:$0xff]
    %v83 = vld [vmem:[%s3 + $0x8] sm:$0xff]
    %v84 = vld [vmem:[%s3 + $0x10] sm:$0xff]
    %v85 = vld [vmem:[%s3 + $0x18] sm:$0xff]
    %v86 = vld [vmem:[%s3 + $0x20] sm:$0xff]
    %v87 = vld [vmem:[%s3 + $0x28] sm:$0xff]
    %v88 = vld [vmem:[%s3 + $0x30] sm:$0xff]
    %v89 = vld [vmem:[%s3 + $0x38] sm:$0xff]
    %v90 = vld [vmem:[%s3 + $0x40] sm:$0xff]
    %v91 = vld [vmem:[%s3 + $0x48] sm:$0xff]
    %v92 = vld [vmem:[%s3 + $0x50] sm:$0xff]
    %v93 = vld [vmem:[%s3 + $0x58] sm:$0xff]
    %v94 = vld [vmem:[%s3 + $0x60] sm:$0xff]
    %v95 = vld [vmem:[%s3 + $0x68] sm:$0xff]
    %v96 = vld [vmem:[%s3 + $0x70] sm:$0xff]
    %v97 = vld [vmem:[%s3 + $0x78] sm:$0xff]
    %98 = vmatpush.msra.mxu0 %v97
    %99 = vmatpush.msra.mxu0 %v96
    %100 = vmatpush.msra.mxu0 %v95
    %101 = vmatpush.msra.mxu0 %v94
    %102 = vmatpush.msra.mxu0 %v93
    %103 = vmatpush.msra.mxu0 %v92
    %104 = vmatpush.msra.mxu0 %v91
    %105 = vmatpush.msra.mxu0 %v90
    %106 = vmatpush.msra.mxu0 %v89
    %107 = vmatpush.msra.mxu0 %v88
    %108 = vmatpush.msra.mxu0 %v87
    %109 = vmatpush.msra.mxu0 %v86
    %110 = vmatpush.msra.mxu0 %v85
    %111 = vmatpush.msra.mxu0 %v84
    %112 = vmatpush.msra.mxu0 %v83
    %113 = vmatpush.msra.mxu0 %v82
    %114 = vmatmul.f32.gmra.mxu0 %v79
    %v115 = vpop.f32.mrf.mxu0
    %v116 = vadd.f32 0.0, %v115
    %117 = vdwg.mxu0
    %v119 = vperm.slane %v81, 0
    %v121 = vadd.f32 %v119, %v116
    %s122 = scalar_lea.vmem %s3, 128
    %v123 = vld [vmem:[%s122] sm:$0xff]
    %v124 = vld [vmem:[%s122 + $0x8] sm:$0xff]
    %v125 = vld [vmem:[%s122 + $0x10] sm:$0xff]
    %v126 = vld [vmem:[%s122 + $0x18] sm:$0xff]
    %v127 = vld [vmem:[%s122 + $0x20] sm:$0xff]
    %v128 = vld [vmem:[%s122 + $0x28] sm:$0xff]
    %v129 = vld [vmem:[%s122 + $0x30] sm:$0xff]
    %v130 = vld [vmem:[%s122 + $0x38] sm:$0xff]
    %v131 = vld [vmem:[%s122 + $0x40] sm:$0xff]
    %v132 = vld [vmem:[%s122 + $0x48] sm:$0xff]
    %v133 = vld [vmem:[%s122 + $0x50] sm:$0xff]
    %v134 = vld [vmem:[%s122 + $0x58] sm:$0xff]
    %v135 = vld [vmem:[%s122 + $0x60] sm:$0xff]
    %v136 = vld [vmem:[%s122 + $0x68] sm:$0xff]
    %v137 = vld [vmem:[%s122 + $0x70] sm:$0xff]
    %v138 = vld [vmem:[%s122 + $0x78] sm:$0xff]
    %v140 = vrot.slane %v79, 2
    %142 = vmatpush.msra.mxu0 %v138
    %143 = vmatpush.msra.mxu0 %v137
    %144 = vmatpush.msra.mxu0 %v136
    %145 = vmatpush.msra.mxu0 %v135
    %146 = vmatpush.msra.mxu0 %v134
    %147 = vmatpush.msra.mxu0 %v133
    %148 = vmatpush.msra.mxu0 %v132
    %149 = vmatpush.msra.mxu0 %v131
    %150 = vmatpush.msra.mxu0 %v130
    %151 = vmatpush.msra.mxu0 %v129
    %152 = vmatpush.msra.mxu0 %v128
    %153 = vmatpush.msra.mxu0 %v127
    %154 = vmatpush.msra.mxu0 %v126
    %155 = vmatpush.msra.mxu0 %v125
    %156 = vmatpush.msra.mxu0 %v124
    %157 = vmatpush.msra.mxu0 %v123
    %158 = vmatmul.f32.gmra.mxu0 %v140
    %v159 = vpop.f32.mrf.mxu0
    %v160 = vadd.f32 0.0, %v159
    %161 = vdwg.mxu0
    %v162 = vadd.f32 %v121, %v160
    %s163 = scalar_lea.vmem %s3, 256
    %v164 = vld [vmem:[%s163] sm:$0xff]
    %v165 = vld [vmem:[%s163 + $0x8] sm:$0xff]
    %v166 = vld [vmem:[%s163 + $0x10] sm:$0xff]
    %v167 = vld [vmem:[%s163 + $0x18] sm:$0xff]
    %v168 = vld [vmem:[%s163 + $0x20] sm:$0xff]
    %v169 = vld [vmem:[%s163 + $0x28] sm:$0xff]
    %v170 = vld [vmem:[%s163 + $0x30] sm:$0xff]
    %v171 = vld [vmem:[%s163 + $0x38] sm:$0xff]
    %v172 = vld [vmem:[%s163 + $0x40] sm:$0xff]
    %v173 = vld [vmem:[%s163 + $0x48] sm:$0xff]
    %v174 = vld [vmem:[%s163 + $0x50] sm:$0xff]
    %v175 = vld [vmem:[%s163 + $0x58] sm:$0xff]
    %v176 = vld [vmem:[%s163 + $0x60] sm:$0xff]
    %v177 = vld [vmem:[%s163 + $0x68] sm:$0xff]
    %v178 = vld [vmem:[%s163 + $0x70] sm:$0xff]
    %v179 = vld [vmem:[%s163 + $0x78] sm:$0xff]
    %v180 = vrot.slane %v79, 4
    %182 = vmatpush.msra.mxu0 %v179
    %183 = vmatpush.msra.mxu0 %v178
    %184 = vmatpush.msra.mxu0 %v177
    %185 = vmatpush.msra.mxu0 %v176
    %186 = vmatpush.msra.mxu0 %v175
    %187 = vmatpush.msra.mxu0 %v174
    %188 = vmatpush.msra.mxu0 %v173
    %189 = vmatpush.msra.mxu0 %v172
    %190 = vmatpush.msra.mxu0 %v171
    %191 = vmatpush.msra.mxu0 %v170
    %192 = vmatpush.msra.mxu0 %v169
    %193 = vmatpush.msra.mxu0 %v168
    %194 = vmatpush.msra.mxu0 %v167
    %195 = vmatpush.msra.mxu0 %v166
    %196 = vmatpush.msra.mxu0 %v165
    %197 = vmatpush.msra.mxu0 %v164
    %198 = vmatmul.f32.gmra.mxu0 %v180
    %v199 = vpop.f32.mrf.mxu0
    %v200 = vadd.f32 0.0, %v199
    %201 = vdwg.mxu0
    %v202 = vadd.f32 %v162, %v200
    %s203 = scalar_lea.vmem %s3, 384
    %v204 = vld [vmem:[%s203] sm:$0xff]
    %v205 = vld [vmem:[%s203 + $0x8] sm:$0xff]
    %v206 = vld [vmem:[%s203 + $0x10] sm:$0xff]
    %v207 = vld [vmem:[%s203 + $0x18] sm:$0xff]
    %v208 = vld [vmem:[%s203 + $0x20] sm:$0xff]
    %v209 = vld [vmem:[%s203 + $0x28] sm:$0xff]
    %v210 = vld [vmem:[%s203 + $0x30] sm:$0xff]
    %v211 = vld [vmem:[%s203 + $0x38] sm:$0xff]
    %v212 = vld [vmem:[%s203 + $0x40] sm:$0xff]
    %v213 = vld [vmem:[%s203 + $0x48] sm:$0xff]
    %v214 = vld [vmem:[%s203 + $0x50] sm:$0xff]
    %v215 = vld [vmem:[%s203 + $0x58] sm:$0xff]
    %v216 = vld [vmem:[%s203 + $0x60] sm:$0xff]
    %v217 = vld [vmem:[%s203 + $0x68] sm:$0xff]
    %v218 = vld [vmem:[%s203 + $0x70] sm:$0xff]
    %v219 = vld [vmem:[%s203 + $0x78] sm:$0xff]
    %v220 = vrot.slane %v79, 6
    %222 = vmatpush.msra.mxu0 %v219
    %223 = vmatpush.msra.mxu0 %v218
    %224 = vmatpush.msra.mxu0 %v217
    %225 = vmatpush.msra.mxu0 %v216
    %226 = vmatpush.msra.mxu0 %v215
    %227 = vmatpush.msra.mxu0 %v214
    %228 = vmatpush.msra.mxu0 %v213
    %229 = vmatpush.msra.mxu0 %v212
    %230 = vmatpush.msra.mxu0 %v211
    %231 = vmatpush.msra.mxu0 %v210
    %232 = vmatpush.msra.mxu0 %v209
    %233 = vmatpush.msra.mxu0 %v208
    %234 = vmatpush.msra.mxu0 %v207
    %235 = vmatpush.msra.mxu0 %v206
    %236 = vmatpush.msra.mxu0 %v205
    %237 = vmatpush.msra.mxu0 %v204
    %238 = vmatmul.f32.gmra.mxu0 %v220
    %v239 = vpop.f32.mrf.mxu0
    %v240 = vadd.f32 0.0, %v239
    %241 = vdwg.mxu0
    %v242 = vadd.f32 %v202, %v240
    %s243 = scalar_lea.vmem %s3, 512
    %v244 = vld [vmem:[%s243] sm:$0xff]
    %v245 = vld [vmem:[%s243 + $0x8] sm:$0xff]
    %v246 = vld [vmem:[%s243 + $0x10] sm:$0xff]
    %v247 = vld [vmem:[%s243 + $0x18] sm:$0xff]
    %v248 = vld [vmem:[%s243 + $0x20] sm:$0xff]
    %v249 = vld [vmem:[%s243 + $0x28] sm:$0xff]
    %v250 = vld [vmem:[%s243 + $0x30] sm:$0xff]
    %v251 = vld [vmem:[%s243 + $0x38] sm:$0xff]
    %v252 = vld [vmem:[%s243 + $0x40] sm:$0xff]
    %v253 = vld [vmem:[%s243 + $0x48] sm:$0xff]
    %v254 = vld [vmem:[%s243 + $0x50] sm:$0xff]
    %v255 = vld [vmem:[%s243 + $0x58] sm:$0xff]
    %v256 = vld [vmem:[%s243 + $0x60] sm:$0xff]
    %v257 = vld [vmem:[%s243 + $0x68] sm:$0xff]
    %v258 = vld [vmem:[%s243 + $0x70] sm:$0xff]
    %v259 = vld [vmem:[%s243 + $0x78] sm:$0xff]
    %260 = vmatpush.msra.mxu0 %v259
    %261 = vmatpush.msra.mxu0 %v258
    %262 = vmatpush.msra.mxu0 %v257
    %263 = vmatpush.msra.mxu0 %v256
    %264 = vmatpush.msra.mxu0 %v255
    %265 = vmatpush.msra.mxu0 %v254
    %266 = vmatpush.msra.mxu0 %v253
    %267 = vmatpush.msra.mxu0 %v252
    %268 = vmatpush.msra.mxu0 %v251
    %269 = vmatpush.msra.mxu0 %v250
    %270 = vmatpush.msra.mxu0 %v249
    %271 = vmatpush.msra.mxu0 %v248
    %272 = vmatpush.msra.mxu0 %v247
    %273 = vmatpush.msra.mxu0 %v246
    %274 = vmatpush.msra.mxu0 %v245
    %275 = vmatpush.msra.mxu0 %v244
    %276 = vmatmul.f32.gmra.mxu0 %v80
    %v277 = vpop.f32.mrf.mxu0
    %v278 = vadd.f32 0.0, %v277
    %279 = vdwg.mxu0
    %v280 = vadd.f32 %v242, %v278
    %v281 = vmax.f32 %v280, 0.0
    %v282 = vld [vmem:[%s5] sm:$0x3]
    %v283 = vld [vmem:[%s6] sm:$0xff]
    %v284 = vld [vmem:[%s6 + $0x8] sm:$0x1]
    %v285 = vld [vmem:[%s7] sm:$0x1]
    %v287 = vperm.slane %v285, 0
    %vm289 = vcmask 72704
    %v291 = vsel %vm289, %v282, 0
    %vm293 = vcmask 1040384
    %v295 = vsel %vm293, %v284, 0
    %297 = vmatpush.msra.mxu0 0.0
    %298 = vmatpush.msra.mxu0 0.0
    %299 = vmatpush.msra.mxu0 0.0
    %300 = vmatpush.msra.mxu0 0.0
    %301 = vmatpush.msra.mxu0 0.0
    %302 = vmatpush.msra.mxu0 0.0
    %303 = vmatpush.msra.mxu0 0.0
    %304 = vmatpush.msra.mxu0 0.0
    %305 = vmatpush.msra.mxu0 0.0
    %306 = vmatpush.msra.mxu0 0.0
    %307 = vmatpush.msra.mxu0 0.0
    %308 = vmatpush.msra.mxu0 0.0
    %309 = vmatpush.msra.mxu0 0.0
    %310 = vmatpush.msra.mxu0 0.0
    %311 = vmatpush.msra.mxu0 %v295
    %312 = vmatpush.msra.mxu0 %v283
    %313 = vmatmul.f32.gmra.mxu0 %v291
    %v314 = vpop.f32.mrf.mxu0
    %v315 = vadd.f32 %v287, %v314
    %316 = vdwg.mxu0
    %v317 = vmax.f32 %v315, 0.0
    %v318 = vadd.f32 %v281, %v317
    %v319 = vld [vmem:[%s8] sm:$0xff]
    %v320 = vld [vmem:[%s8 + $0x8] sm:$0xff]
    %v321 = vld [vmem:[%s8 + $0x10] sm:$0xff]
    %v322 = vld [vmem:[%s8 + $0x18] sm:$0xff]
    %v323 = vld [vmem:[%s8 + $0x20] sm:$0xff]
    %v324 = vld [vmem:[%s8 + $0x28] sm:$0xff]
    %v325 = vld [vmem:[%s8 + $0x30] sm:$0xff]
    %v326 = vld [vmem:[%s8 + $0x38] sm:$0xff]
    %v327 = vld [vmem:[%s8 + $0x40] sm:$0xff]
    %v328 = vld [vmem:[%s8 + $0x48] sm:$0xff]
    %v329 = vld [vmem:[%s8 + $0x50] sm:$0xff]
    %v330 = vld [vmem:[%s8 + $0x58] sm:$0xff]
    %v331 = vld [vmem:[%s8 + $0x60] sm:$0xff]
    %v332 = vld [vmem:[%s8 + $0x68] sm:$0xff]
    %v333 = vld [vmem:[%s8 + $0x70] sm:$0xff]
    %v334 = vld [vmem:[%s8 + $0x78] sm:$0xff]
    %v335 = vld [vmem:[%s9] sm:$0x1]
    %v337 = vperm.slane %v335, 0
    %339 = vmatpush.msra.mxu0 %v334
    %340 = vmatpush.msra.mxu0 %v333
    %341 = vmatpush.msra.mxu0 %v332
    %342 = vmatpush.msra.mxu0 %v331
    %343 = vmatpush.msra.mxu0 %v330
    %344 = vmatpush.msra.mxu0 %v329
    %345 = vmatpush.msra.mxu0 %v328
    %346 = vmatpush.msra.mxu0 %v327
    %347 = vmatpush.msra.mxu0 %v326
    %348 = vmatpush.msra.mxu0 %v325
    %349 = vmatpush.msra.mxu0 %v324
    %350 = vmatpush.msra.mxu0 %v323
    %351 = vmatpush.msra.mxu0 %v322
    %352 = vmatpush.msra.mxu0 %v321
    %353 = vmatpush.msra.mxu0 %v320
    %354 = vmatpush.msra.mxu0 %v319
    %355 = vmatmul.f32.gmra.mxu0 %v318
    %v356 = vpop.f32.mrf.mxu0
    %v357 = vadd.f32 %v337, %v356
    %358 = vdwg.mxu0
    %v359 = vmax.f32 %v357, 0.0
    %360 = vst [vmem:[#allocation2] sm:$0x3] %v359
    // Predicated region
    $region42: #{test_convnet2_forward.1} parent=1 // pred_check
      _
    $region43: #{test_convnet2_forward.1} parent=1 // pred_check_branch
      %362 = sbr.rel (0) target = $region45
    $region44: #{test_convnet2_forward.1} parent=1 // pred_region
      %364 = vsyncadd [#allocation3], 0
      %s366 = sshll.u32 [#allocation2], 4
      %s367 = int_to_ptr.vmem [resolvable:$true] %s366
      %s368 = sshll.u32 %s10, 4
      %s369 = int_to_ptr.hbm [resolvable:$true] %s368
      %371 = dma.vmem_to_hbm [thread:$0]  %s367, 32, %s369, [#allocation3]
    $region45: #{test_convnet2_forward.1} parent=1 // pred_fallthru
      _
    // Predicated region
    $region46: #{test_convnet2_forward.1} parent=1 // pred_check
      _
    $region47: #{test_convnet2_forward.1} parent=1 // pred_check_branch
      %373 = sbr.rel (0) target = $region49
    $region48: #{test_convnet2_forward.1} parent=1 // pred_region
      %375 = dma.done [#allocation3], 32
    $region49: #{test_convnet2_forward.1} parent=1 // pred_fallthru
      _
    %376 = vsyncpa [#allocation3], 1

</llo_original>
